<compile_context>
chip_gen: v7x
topology: tpu7x:2x2x1
jax: 0.10.0
libtpu: 0.0.40
codegen_flags: <defaults>
</compile_context>

<pallas_src>
import functools

import jax
import jax.numpy as jnp
import numpy as np
from jax import lax
from jax.experimental import pallas as pl
from jax.experimental.pallas import tpu as pltpu

# Module hyper-parameters (SpecAugment.__init__ defaults).
FREQ_MASK = 20
TIME_MASK = 50
FREQ_STRIPES = 2
TIME_STRIPES = 2
P = 1.0

_MIB = 1024 * 1024


# ----------------------------------------------------------------------------
# Hardware-aware sizing
# ----------------------------------------------------------------------------
def _hw_budget():
    """Returns (vmem_capacity, scoped_vmem_limit, target_block_bytes, want_two_blocks)."""
    cap = 128 * _MIB
    try:
        info = pltpu.get_tpu_info()
        cap = int(getattr(info, "vmem_capacity_bytes", cap) or cap)
    except Exception:
        pass
    if cap <= 64 * _MIB:
        # v7x-class: 64 MiB VMEM, 2 TensorCores -> want >= 2 blocks when affordable.
        return cap, 32 * _MIB, 4 * _MIB, True
    # v5e / v6e: 128 MiB VMEM, single TensorCore -> no grid-splitting rule.
    return cap, 64 * _MIB, 8 * _MIB, False


def _choose_blk(bc, per_example_bytes, target_bytes, want_two_blocks):
    """Examples per block: near target_bytes; on v7x keep >=2 blocks when >=1 MiB each."""
    blk = max(1, min(bc, target_bytes // max(1, per_example_bytes)))
    if want_two_blocks and bc >= 2 and blk >= bc:
        half = (bc + 1) // 2
        if half * per_example_bytes >= 1 * _MIB:  # never at the cost of sub-1-MiB tiles
            blk = half
    return blk


# ----------------------------------------------------------------------------
# Kernel
# ----------------------------------------------------------------------------
def _specaug_kernel(x_ref, bnd_ref, o_ref, *, freq_stripes, time_stripes):
    """Masks one batched block.

    x_ref   : (BLK, F, T) spectrogram tile
    bnd_ref : (BLK, 1, 2*(freq_stripes+time_stripes)) int32 stripe [start, end) pairs,
              freq stripes first, then time stripes
    o_ref   : (BLK, F, T) output tile (aliased with the input buffer)
    """
    blk, f, t = x_ref.shape
    bnd = bnd_ref[...]                                         # (BLK, 1, NB)

    # Separable "masked" indicators, built on small shapes (never (BLK,F,T)):
    #   masked_f[b, f, 0] = any stripe covers freq row f of example b
    #   masked_t[b, 0, t] = any stripe covers time col t of example b
    f_idx = lax.broadcasted_iota(jnp.int32, (blk, f, 1), 1)
    t_idx = lax.broadcasted_iota(jnp.int32, (blk, 1, t), 2)

    masked_f = jnp.zeros((blk, f, 1), dtype=jnp.bool_)
    masked_t = jnp.zeros((blk, 1, t), dtype=jnp.bool_)
    col = 0
    for _ in range(freq_stripes):
        s = bnd[:, :, col:col + 1]                             # (BLK, 1, 1)
        e = bnd[:, :, col + 1:col + 2]
        masked_f = masked_f | ((f_idx >= s) & (f_idx < e))
        col += 2
    for _ in range(time_stripes):
        s = bnd[:, :, col:col + 1]
        e = bnd[:, :, col + 1:col + 2]
        masked_t = masked_t | ((t_idx >= s) & (t_idx < e))
        col += 2

    # Full-size work: one broadcast OR + one select per element (mask_value = 0.0).
    x = x_ref[...]
    o_ref[...] = jnp.where(masked_f | masked_t, jnp.zeros_like(x), x)


# ----------------------------------------------------------------------------
# Wrapper
# ----------------------------------------------------------------------------
def _sample_stripe_bounds(key, p, freq_mask, time_mask, freq_stripes, time_stripes, bc, f, t):
    """Per-(b,c) stripe [start, end) boundaries, shape (bc, 2*(freq_stripes+time_stripes))."""
    key, kg = jax.random.split(key)
    # Module gate: `if self.p > torch.randn(1)` — standard normal, one draw per call,
    # shared across batch and both axes.  Gate off -> zero-width stripes (identity).
    apply_gate = p > jax.random.normal(kg, (), dtype=jnp.float32)
    cols = []
    for mask_param, axis_size, n_stripes in ((freq_mask, f, freq_stripes),
                                             (time_mask, t, time_stripes)):
        for _ in range(n_stripes):
            key, k1, k2 = jax.random.split(key, 3)
            value = jax.random.uniform(k1, (bc,), dtype=jnp.float32) * mask_param
            min_value = jax.random.uniform(k2, (bc,), dtype=jnp.float32) * (axis_size - value)
            start = min_value.astype(jnp.int32)
            end = (min_value + value).astype(jnp.int32)
            end = jnp.where(apply_gate, end, start)
            cols.append(start)
            cols.append(end)
    return jnp.stack(cols, axis=-1)                            # (bc, nb) int32


def _apply_masks(x, bounds, freq_stripes, time_stripes):
    """x: (BC, F, T); bounds: (BC, 2*(freq_stripes+time_stripes)) int32."""
    bc, f, t = x.shape
    nb = bounds.shape[-1]
    if nb == 0:
        return x

    cap, base_limit, target_bytes, want_two = _hw_budget()
    per_example = f * t * x.dtype.itemsize
    blk = _choose_blk(bc, per_example, target_bytes, want_two)
    grid = pl.cdiv(bc, blk)
    bc_pad = grid * blk
    if bc_pad != bc:
        # Awkward/prime BC: pad the example axis instead of shrinking blk.  Padded
        # rows get zero-width stripes and are sliced off after the call.
        x = jnp.pad(x, ((0, bc_pad - bc), (0, 0), (0, 0)))
        bounds = jnp.pad(bounds, ((0, bc_pad - bc), (0, 0)))
    bnd3 = bounds.reshape(bc_pad, 1, nb)

    # in + out data blocks double-buffered + tiny (sublane/lane padded) bounds
    # blocks + slack; normally covered by the generation's base limit.
    need = 4 * blk * per_example + 2 * blk * 8 * 128 * 4 + 4 * _MIB
    vmem_limit = int(min(max(base_limit, need), cap * 9 // 10))

    kernel = functools.partial(_specaug_kernel,
                               freq_stripes=freq_stripes, time_stripes=time_stripes)
    out = pl.pallas_call(
        kernel,
        out_shape=jax.ShapeDtypeStruct((bc_pad, f, t), x.dtype),
        grid=(grid,),
        in_specs=[
            pl.BlockSpec((blk, f, t), lambda i: (i, 0, 0)),
            pl.BlockSpec((blk, 1, nb), lambda i: (i, 0, 0)),
        ],
        out_specs=pl.BlockSpec((blk, f, t), lambda i: (i, 0, 0)),
        compiler_params=pltpu.CompilerParams(
            dimension_semantics=("parallel",),
            vmem_limit_bytes=vmem_limit,
        ),
        # In-place masking of the (donated) spectrogram buffer.
        input_output_aliases={0: 0},
    )(x, bnd3)
    if bc_pad != bc:
        out = out[:bc]
    return out


@functools.partial(
    jax.jit,
    donate_argnums=(0,),   # makes the input/output alias genuinely in-place (no defensive copy)
    static_argnames=("p", "freq_mask", "time_mask", "freq_stripes", "time_stripes"))
def spec_augment(audio, key, *, p=P, freq_mask=FREQ_MASK, time_mask=TIME_MASK,
                 freq_stripes=FREQ_STRIPES, time_stripes=TIME_STRIPES):
    """audio: (B, C, F, T) float spectrogram (donated).  Returns same shape/dtype."""
    b, c, f, t = audio.shape
    bc = b * c
    x = audio.reshape(bc, f, t)
    bounds = _sample_stripe_bounds(key, p, freq_mask, time_mask,
                                   freq_stripes, time_stripes, bc, f, t)
    out = _apply_masks(x, bounds, freq_stripes, time_stripes)
    return out.reshape(b, c, f, t)


# ----------------------------------------------------------------------------
# Pure-JAX reference (same stripe boundaries -> bit-identical expectation)
# ----------------------------------------------------------------------------
def _reference(audio, bounds, freq_stripes, time_stripes):
    b, c, f, t = audio.shape
    x = audio.reshape(b * c, f, t)
    f_idx = jnp.arange(f, dtype=jnp.int32)[None, :]
    t_idx = jnp.arange(t, dtype=jnp.int32)[None, :]
    masked_f = jnp.zeros((b * c, f), dtype=bool)
    masked_t = jnp.zeros((b * c, t), dtype=bool)
    col = 0
    for _ in range(freq_stripes):
        s, e = bounds[:, col:col + 1], bounds[:, col + 1:col + 2]
        masked_f = masked_f | ((f_idx >= s) & (f_idx < e))
        col += 2
    for _ in range(time_stripes):
        s, e = bounds[:, col:col + 1], bounds[:, col + 1:col + 2]
        masked_t = masked_t | ((t_idx >= s) & (t_idx < e))
        col += 2
    masked = masked_f[:, :, None] | masked_t[:, None, :]
    return jnp.where(masked, 0.0, x).reshape(b, c, f, t)


if __name__ == "__main__":
    key = jax.random.PRNGKey(0)
    k_data, k_aug = jax.random.split(key)

    # Small spectrogram: batch=2, channels=1, freq=64, time=128.
    B, C, F, T = 2, 1, 64, 128
    audio = jax.random.normal(k_data, (B, C, F, T), dtype=jnp.float32)

    # Host copy + reference BEFORE the kernel call: `audio` is donated (masked
    # in place) and must not be read afterwards.
    audio_host = np.asarray(audio)
    bounds = _sample_stripe_bounds(k_aug, P, FREQ_MASK, TIME_MASK,
                                   FREQ_STRIPES, TIME_STRIPES, B * C, F, T)
    ref = np.asarray(_reference(audio, bounds, FREQ_STRIPES, TIME_STRIPES))

    out = spec_augment(audio, k_aug)          # donates `audio`
    out = jax.block_until_ready(out)
    assert out.shape == (B, C, F, T) and out.dtype == jnp.float32

    out_host = np.asarray(out)
    assert np.allclose(out_host, ref), "kernel output != pure-JAX reference"
    # Sanity: output contains only zeros or the original values.
    assert np.all(np.isclose(out_host, audio_host) | (out_host == 0.0))

    print("KERNEL_OK")
</pallas_src>

<mosaic_0001>
module attributes {stable_mosaic.version = 11 : i64} {
  func.func @_specaug_kernel(%arg0: i32, %arg1: memref<2x64x128xf32, #tpu.memory_space<vmem>>, %arg2: memref<2x1x8xi32, #tpu.memory_space<vmem>>, %arg3: memref<2x64x128xf32, #tpu.memory_space<vmem>>) attributes {dimension_semantics = [#tpu.dimension_semantics<parallel>], iteration_bounds = array<i64: 1>, scalar_prefetch = 0 : i64, scratch_operands = 0 : i64, tpu.core_type = #tpu.core_type<tc>, window_params = [{transform_indices = @transform_0, window_bounds = array<i64: 2, 64, 128>}, {transform_indices = @transform_1, window_bounds = array<i64: 2, 1, 8>}, {transform_indices = @transform_2, window_bounds = array<i64: 2, 64, 128>}]} {
    %c0 = arith.constant 0 : index
    %c0_0 = arith.constant 0 : index
    %c0_1 = arith.constant 0 : index
    %0 = vector.load %arg2[%c0, %c0_0, %c0_1] : memref<2x1x8xi32, #tpu.memory_space<vmem>>, vector<2x1x8xi32>
    %1 = tpu.iota {dimensions = array<i32: 1>} : vector<2x64x1xi32>
    %2 = tpu.iota {dimensions = array<i32: 2>} : vector<2x1x128xi32>
    %false = arith.constant false
    %3 = vector.broadcast %false : i1 to vector<2x64x1xi1>
    %false_2 = arith.constant false
    %4 = vector.broadcast %false_2 : i1 to vector<2x1x128xi1>
    %5 = vector.extract_strided_slice %0 {offsets = [0, 0, 0], sizes = [2, 1, 1], strides = [1, 1, 1]} : vector<2x1x8xi32> to vector<2x1x1xi32>
    %6 = vector.extract_strided_slice %0 {offsets = [0, 0, 1], sizes = [2, 1, 1], strides = [1, 1, 1]} : vector<2x1x8xi32> to vector<2x1x1xi32>
    %7 = vector.broadcast %5 : vector<2x1x1xi32> to vector<2x64x1xi32>
    %8 = arith.cmpi sge, %1, %7 : vector<2x64x1xi32>
    %9 = vector.broadcast %6 : vector<2x1x1xi32> to vector<2x64x1xi32>
    %10 = arith.cmpi slt, %1, %9 : vector<2x64x1xi32>
    %11 = arith.andi %8, %10 : vector<2x64x1xi1>
    %12 = arith.ori %3, %11 : vector<2x64x1xi1>
    %13 = vector.extract_strided_slice %0 {offsets = [0, 0, 2], sizes = [2, 1, 1], strides = [1, 1, 1]} : vector<2x1x8xi32> to vector<2x1x1xi32>
    %14 = vector.extract_strided_slice %0 {offsets = [0, 0, 3], sizes = [2, 1, 1], strides = [1, 1, 1]} : vector<2x1x8xi32> to vector<2x1x1xi32>
    %15 = vector.broadcast %13 : vector<2x1x1xi32> to vector<2x64x1xi32>
    %16 = arith.cmpi sge, %1, %15 : vector<2x64x1xi32>
    %17 = vector.broadcast %14 : vector<2x1x1xi32> to vector<2x64x1xi32>
    %18 = arith.cmpi slt, %1, %17 : vector<2x64x1xi32>
    %19 = arith.andi %16, %18 : vector<2x64x1xi1>
    %20 = arith.ori %12, %19 : vector<2x64x1xi1>
    %21 = vector.extract_strided_slice %0 {offsets = [0, 0, 4], sizes = [2, 1, 1], strides = [1, 1, 1]} : vector<2x1x8xi32> to vector<2x1x1xi32>
    %22 = vector.extract_strided_slice %0 {offsets = [0, 0, 5], sizes = [2, 1, 1], strides = [1, 1, 1]} : vector<2x1x8xi32> to vector<2x1x1xi32>
    %23 = vector.broadcast %21 : vector<2x1x1xi32> to vector<2x1x128xi32>
    %24 = arith.cmpi sge, %2, %23 : vector<2x1x128xi32>
    %25 = vector.broadcast %22 : vector<2x1x1xi32> to vector<2x1x128xi32>
    %26 = arith.cmpi slt, %2, %25 : vector<2x1x128xi32>
    %27 = arith.andi %24, %26 : vector<2x1x128xi1>
    %28 = arith.ori %4, %27 : vector<2x1x128xi1>
    %29 = vector.extract_strided_slice %0 {offsets = [0, 0, 6], sizes = [2, 1, 1], strides = [1, 1, 1]} : vector<2x1x8xi32> to vector<2x1x1xi32>
    %30 = vector.extract_strided_slice %0 {offsets = [0, 0, 7], sizes = [2, 1, 1], strides = [1, 1, 1]} : vector<2x1x8xi32> to vector<2x1x1xi32>
    %31 = vector.broadcast %29 : vector<2x1x1xi32> to vector<2x1x128xi32>
    %32 = arith.cmpi sge, %2, %31 : vector<2x1x128xi32>
    %33 = vector.broadcast %30 : vector<2x1x1xi32> to vector<2x1x128xi32>
    %34 = arith.cmpi slt, %2, %33 : vector<2x1x128xi32>
    %35 = arith.andi %32, %34 : vector<2x1x128xi1>
    %36 = arith.ori %28, %35 : vector<2x1x128xi1>
    %c0_3 = arith.constant 0 : index
    %c0_4 = arith.constant 0 : index
    %c0_5 = arith.constant 0 : index
    %37 = vector.load %arg1[%c0_3, %c0_4, %c0_5] : memref<2x64x128xf32, #tpu.memory_space<vmem>>, vector<2x64x128xf32>
    %38 = vector.broadcast %20 : vector<2x64x1xi1> to vector<2x64x128xi1>
    %39 = vector.broadcast %36 : vector<2x1x128xi1> to vector<2x64x128xi1>
    %40 = arith.ori %38, %39 : vector<2x64x128xi1>
    %cst = arith.constant 0.000000e+00 : f32
    %41 = vector.broadcast %cst : f32 to vector<2x64x128xf32>
    %42 = arith.select %40, %41, %37 : vector<2x64x128xi1>, vector<2x64x128xf32>
    %c0_6 = arith.constant 0 : index
    %c0_7 = arith.constant 0 : index
    %c0_8 = arith.constant 0 : index
    %43 = vector.load %arg3[%c0_6, %c0_7, %c0_8] : memref<2x64x128xf32, #tpu.memory_space<vmem>>, vector<2x64x128xf32>
    tpu.vector_store %arg3[%c0_6, %c0_7, %c0_8], %42 {strides = array<i32>} : memref<2x64x128xf32, #tpu.memory_space<vmem>>, vector<2x64x128xf32>,
    return
  }
  func.func @transform_0(%arg0: i32) -> (i32, i32, i32) {
    %c0_i32 = arith.constant 0 : i32
    %c0_i32_0 = arith.constant 0 : i32
    %c0_i32_1 = arith.constant 0 : i32
    return %arg0, %c0_i32, %c0_i32_0 : i32, i32, i32
  }
  func.func @transform_1(%arg0: i32) -> (i32, i32, i32) {
    %c0_i32 = arith.constant 0 : i32
    %c0_i32_0 = arith.constant 0 : i32
    %c0_i32_1 = arith.constant 0 : i32
    return %arg0, %c0_i32, %c0_i32_0 : i32, i32, i32
  }
  func.func @transform_2(%arg0: i32) -> (i32, i32, i32) {
    %c0_i32 = arith.constant 0 : i32
    %c0_i32_0 = arith.constant 0 : i32
    %c0_i32_1 = arith.constant 0 : i32
    return %arg0, %c0_i32, %c0_i32_0 : i32, i32, i32
  }
}

</mosaic_0001>

<llo_original>
// kernel: spec_augment.1
$region0: #{spec_augment.1}
  #allocation0 [shape = 'u32[]', space=smem, size = 0x4, offset = 0x4, fixed_abs, tag = 'smem constant byte address 0x4 - core index']
  #allocation1 [shape = 'u32[144,128]{1,0:T(1,128)}', space=vmem, size = 0x12000, scoped, tag = 'internal scratch']
  %s0 = inlined_call_operand.hbm [shape: f32[2,64,128], index: 0, kind: input, shape index: {}, may-alias: {0,2}]
  %s1 = inlined_call_operand.hbm [shape: s32[2,1,8], index: 1, kind: input, shape index: {}]
  %s2 = inlined_call_operand.hbm [shape: f32[2,64,128], index: 2, kind: output, shape index: {}, may-alias: {0,2}]
  %s3 = sld [smem:[#allocation0]]
  $region26: #{spec_augment.1} parent=0
    _
  %s5 = ssub.s32 1, %s3
  %s6 = scalar_select 0, %s5, %s3
  $region1: #{spec_augment.1} parent=0
    #allocation2 [shape = 'u8[65536]{0}', space=vmem, size = 0x10000, scoped, tag = 'input window, operand 0, single buffered']
    #allocation3 [shape = 's32[1]{0}', space=sflag, size = 0x4, scoped, tag = 'scoped memory for spec_augment.1']
    #allocation4 [shape = 's32[1]{0}', space=sflag, size = 0x4, scoped, tag = 'scoped memory for spec_augment.1']
    #allocation5 [shape = 'u8[1024]{0}', space=vmem, size = 0x400, scoped, tag = 'input window, operand 1, single buffered']
    #allocation6 [shape = 's32[1]{0}', space=sflag, size = 0x4, scoped, tag = 'scoped memory for spec_augment.1']
    #allocation7 [shape = 'u8[65536]{0}', space=vmem, size = 0x10000, scoped, tag = 'output window, operand 0, single buffered']
    %7 = vsyncpa [#allocation3], 0
    %8 = vsyncpa [#allocation6], 0
    %9 = vsyncpa [#allocation4], 0
    // Predicated region
    $region2: #{spec_augment.1} parent=1 // pred_check
      _
    $region3: #{spec_augment.1} parent=1 // pred_check_branch
      %11 = sbr.rel (0) target = $region5
    $region4: #{spec_augment.1} parent=1 // pred_region
      %s13 = ssub.s32 2048, 2048
      %14 = vsyncadd [#allocation3], %s13
      %s15 = sshll.u32 [#allocation2], 4
      %s16 = int_to_ptr.vmem [resolvable:$true] %s15
      %21 = dma.hbm_to_vmem [thread:$0]  %s0, 2048, %s16, [#allocation3], 128, 128, 8
    $region5: #{spec_augment.1} parent=1 // pred_fallthru
      _
    // Predicated region
    $region6: #{spec_augment.1} parent=1 // pred_check
      _
    $region7: #{spec_augment.1} parent=1 // pred_check_branch
      %23 = sbr.rel (0) target = $region9
    $region8: #{spec_augment.1} parent=1 // pred_region
      %s25 = ssub.s32 32, 32
      %26 = vsyncadd [#allocation6], %s25
      %s27 = sshll.u32 [#allocation5], 4
      %s28 = int_to_ptr.vmem [resolvable:$true] %s27
      %33 = dma.hbm_to_vmem [thread:$0]  %s1, 32, %s28, [#allocation6], 16, 16, 1
    $region9: #{spec_augment.1} parent=1 // pred_fallthru
      _
    // Predicated region
    $region10: #{spec_augment.1} parent=1 // pred_check
      _
    $region11: #{spec_augment.1} parent=1 // pred_check_branch
      %35 = sbr.rel (0) target = $region13
    $region12: #{spec_augment.1} parent=1 // pred_region
      %36 = dma.done [#allocation3], 2048
    $region13: #{spec_augment.1} parent=1 // pred_fallthru
      _
    // Predicated region
    $region14: #{spec_augment.1} parent=1 // pred_check
      _
    $region15: #{spec_augment.1} parent=1 // pred_check_branch
      %38 = sbr.rel (0) target = $region17
    $region16: #{spec_augment.1} parent=1 // pred_region
      %39 = dma.done [#allocation6], 32
    $region17: #{spec_augment.1} parent=1 // pred_fallthru
      _
    %v40 = vld [vmem:[#allocation5] sm:$0x1]
    %v41 = vld [vmem:[#allocation5 + $0x1] sm:$0x1]
    %v42 = vlaneseq
    %v43 = vshrl.u32 %v42, 7
    %v44 = vadd.s32 %v43, 8
    %v45 = vadd.s32 %v43, 16
    %v46 = vadd.s32 %v43, 24
    %v47 = vadd.s32 %v43, 32
    %v48 = vadd.s32 %v43, 40
    %v49 = vadd.s32 %v43, 48
    %v50 = vadd.s32 %v43, 56
    %v51 = vlaneseq
    %v52 = vand.u32 %v51, 127
    %v53 = vlaneseq
    %v54 = vshrl.u32 %v53, 7
    %v55 = vsub.s32 0, %v54
    %v56 = vrot.slane %v40, %v55
    %v57 = vlaneseq
    %v58 = vshrl.u32 %v57, 7
    %v59 = vsub.s32 0, %v58
    %v60 = vrot.slane %v41, %v59
    %vm61 = vcmp.ge.s32.totalorder %v43, %v56
    %vm62 = vcmp.ge.s32.totalorder %v44, %v56
    %vm63 = vcmp.ge.s32.totalorder %v45, %v56
    %vm64 = vcmp.ge.s32.totalorder %v46, %v56
    %vm65 = vcmp.ge.s32.totalorder %v47, %v56
    %vm66 = vcmp.ge.s32.totalorder %v48, %v56
    %vm67 = vcmp.ge.s32.totalorder %v49, %v56
    %vm68 = vcmp.ge.s32.totalorder %v50, %v56
    %vm69 = vcmp.ge.s32.totalorder %v43, %v60
    %vm70 = vcmp.ge.s32.totalorder %v44, %v60
    %vm71 = vcmp.ge.s32.totalorder %v45, %v60
    %vm72 = vcmp.ge.s32.totalorder %v46, %v60
    %vm73 = vcmp.ge.s32.totalorder %v47, %v60
    %vm74 = vcmp.ge.s32.totalorder %v48, %v60
    %vm75 = vcmp.ge.s32.totalorder %v49, %v60
    %vm76 = vcmp.ge.s32.totalorder %v50, %v60
    %vm77 = vcmp.lt.s32.totalorder %v43, %v56
    %vm78 = vcmp.lt.s32.totalorder %v44, %v56
    %vm79 = vcmp.lt.s32.totalorder %v45, %v56
    %vm80 = vcmp.lt.s32.totalorder %v46, %v56
    %vm81 = vcmp.lt.s32.totalorder %v47, %v56
    %vm82 = vcmp.lt.s32.totalorder %v48, %v56
    %vm83 = vcmp.lt.s32.totalorder %v49, %v56
    %vm84 = vcmp.lt.s32.totalorder %v50, %v56
    %vm85 = vcmp.lt.s32.totalorder %v43, %v60
    %vm86 = vcmp.lt.s32.totalorder %v44, %v60
    %vm87 = vcmp.lt.s32.totalorder %v45, %v60
    %vm88 = vcmp.lt.s32.totalorder %v46, %v60
    %vm89 = vcmp.lt.s32.totalorder %v47, %v60
    %vm90 = vcmp.lt.s32.totalorder %v48, %v60
    %vm91 = vcmp.lt.s32.totalorder %v49, %v60
    %vm92 = vcmp.lt.s32.totalorder %v50, %v60
    %v93 = vsel %vm77, 1, 0
    %v94 = vsel %vm78, 1, 0
    %v95 = vsel %vm79, 1, 0
    %v96 = vsel %vm80, 1, 0
    %v97 = vsel %vm81, 1, 0
    %v98 = vsel %vm82, 1, 0
    %v99 = vsel %vm83, 1, 0
    %v100 = vsel %vm84, 1, 0
    %v101 = vsel %vm85, 1, 0
    %v102 = vsel %vm86, 1, 0
    %v103 = vsel %vm87, 1, 0
    %v104 = vsel %vm88, 1, 0
    %v105 = vsel %vm89, 1, 0
    %v106 = vsel %vm90, 1, 0
    %v107 = vsel %vm91, 1, 0
    %v108 = vsel %vm92, 1, 0
    %109 = vrot.lane.b32.xlu0 %v93, 127
    %v110 = vpop.permute.xlu0 %109
    %111 = vrot.lane.b32.xlu0 %v94, 127
    %v112 = vpop.permute.xlu0 %111
    %113 = vrot.lane.b32.xlu0 %v95, 127
    %v114 = vpop.permute.xlu0 %113
    %115 = vrot.lane.b32.xlu0 %v96, 127
    %v116 = vpop.permute.xlu0 %115
    %117 = vrot.lane.b32.xlu0 %v97, 127
    %v118 = vpop.permute.xlu0 %117
    %119 = vrot.lane.b32.xlu0 %v98, 127
    %v120 = vpop.permute.xlu0 %119
    %121 = vrot.lane.b32.xlu0 %v99, 127
    %v122 = vpop.permute.xlu0 %121
    %123 = vrot.lane.b32.xlu0 %v100, 127
    %v124 = vpop.permute.xlu0 %123
    %125 = vrot.lane.b32.xlu0 %v101, 127
    %v126 = vpop.permute.xlu0 %125
    %127 = vrot.lane.b32.xlu0 %v102, 127
    %v128 = vpop.permute.xlu0 %127
    %129 = vrot.lane.b32.xlu0 %v103, 127
    %v130 = vpop.permute.xlu0 %129
    %131 = vrot.lane.b32.xlu0 %v104, 127
    %v132 = vpop.permute.xlu0 %131
    %133 = vrot.lane.b32.xlu0 %v105, 127
    %v134 = vpop.permute.xlu0 %133
    %135 = vrot.lane.b32.xlu0 %v106, 127
    %v136 = vpop.permute.xlu0 %135
    %137 = vrot.lane.b32.xlu0 %v107, 127
    %v138 = vpop.permute.xlu0 %137
    %139 = vrot.lane.b32.xlu0 %v108, 127
    %v140 = vpop.permute.xlu0 %139
    %vm141 = vcmp.ne.s32.totalorder %v110, 0
    %vm142 = vcmp.ne.s32.totalorder %v112, 0
    %vm143 = vcmp.ne.s32.totalorder %v114, 0
    %vm144 = vcmp.ne.s32.totalorder %v116, 0
    %vm145 = vcmp.ne.s32.totalorder %v118, 0
    %vm146 = vcmp.ne.s32.totalorder %v120, 0
    %vm147 = vcmp.ne.s32.totalorder %v122, 0
    %vm148 = vcmp.ne.s32.totalorder %v124, 0
    %vm149 = vcmp.ne.s32.totalorder %v126, 0
    %vm150 = vcmp.ne.s32.totalorder %v128, 0
    %vm151 = vcmp.ne.s32.totalorder %v130, 0
    %vm152 = vcmp.ne.s32.totalorder %v132, 0
    %vm153 = vcmp.ne.s32.totalorder %v134, 0
    %vm154 = vcmp.ne.s32.totalorder %v136, 0
    %vm155 = vcmp.ne.s32.totalorder %v138, 0
    %vm156 = vcmp.ne.s32.totalorder %v140, 0
    %vm157 = vmand %vm61, %vm141
    %vm158 = vmand %vm62, %vm142
    %vm159 = vmand %vm63, %vm143
    %vm160 = vmand %vm64, %vm144
    %vm161 = vmand %vm65, %vm145
    %vm162 = vmand %vm66, %vm146
    %vm163 = vmand %vm67, %vm147
    %vm164 = vmand %vm68, %vm148
    %vm165 = vmand %vm69, %vm149
    %vm166 = vmand %vm70, %vm150
    %vm167 = vmand %vm71, %vm151
    %vm168 = vmand %vm72, %vm152
    %vm169 = vmand %vm73, %vm153
    %vm170 = vmand %vm74, %vm154
    %vm171 = vmand %vm75, %vm155
    %vm172 = vmand %vm76, %vm156
    %v173 = vsel %vm157, 1, 0
    %v174 = vsel %vm158, 1, 0
    %v175 = vsel %vm159, 1, 0
    %v176 = vsel %vm160, 1, 0
    %v177 = vsel %vm161, 1, 0
    %v178 = vsel %vm162, 1, 0
    %v179 = vsel %vm163, 1, 0
    %v180 = vsel %vm164, 1, 0
    %v181 = vsel %vm165, 1, 0
    %v182 = vsel %vm166, 1, 0
    %v183 = vsel %vm167, 1, 0
    %v184 = vsel %vm168, 1, 0
    %v185 = vsel %vm169, 1, 0
    %v186 = vsel %vm170, 1, 0
    %v187 = vsel %vm171, 1, 0
    %v188 = vsel %vm172, 1, 0
    %189 = vrot.lane.b32.xlu0 %v173, 126
    %v190 = vpop.permute.xlu0 %189
    %191 = vrot.lane.b32.xlu0 %v174, 126
    %v192 = vpop.permute.xlu0 %191
    %193 = vrot.lane.b32.xlu0 %v175, 126
    %v194 = vpop.permute.xlu0 %193
    %195 = vrot.lane.b32.xlu0 %v176, 126
    %v196 = vpop.permute.xlu0 %195
    %197 = vrot.lane.b32.xlu0 %v177, 126
    %v198 = vpop.permute.xlu0 %197
    %199 = vrot.lane.b32.xlu0 %v178, 126
    %v200 = vpop.permute.xlu0 %199
    %201 = vrot.lane.b32.xlu0 %v179, 126
    %v202 = vpop.permute.xlu0 %201
    %203 = vrot.lane.b32.xlu0 %v180, 126
    %v204 = vpop.permute.xlu0 %203
    %205 = vrot.lane.b32.xlu0 %v181, 126
    %v206 = vpop.permute.xlu0 %205
    %207 = vrot.lane.b32.xlu0 %v182, 126
    %v208 = vpop.permute.xlu0 %207
    %209 = vrot.lane.b32.xlu0 %v183, 126
    %v210 = vpop.permute.xlu0 %209
    %211 = vrot.lane.b32.xlu0 %v184, 126
    %v212 = vpop.permute.xlu0 %211
    %213 = vrot.lane.b32.xlu0 %v185, 126
    %v214 = vpop.permute.xlu0 %213
    %215 = vrot.lane.b32.xlu0 %v186, 126
    %v216 = vpop.permute.xlu0 %215
    %217 = vrot.lane.b32.xlu0 %v187, 126
    %v218 = vpop.permute.xlu0 %217
    %219 = vrot.lane.b32.xlu0 %v188, 126
    %v220 = vpop.permute.xlu0 %219
    %vm221 = vcmp.ne.s32.totalorder %v190, 0
    %vm222 = vcmp.ne.s32.totalorder %v192, 0
    %vm223 = vcmp.ne.s32.totalorder %v194, 0
    %vm224 = vcmp.ne.s32.totalorder %v196, 0
    %vm225 = vcmp.ne.s32.totalorder %v198, 0
    %vm226 = vcmp.ne.s32.totalorder %v200, 0
    %vm227 = vcmp.ne.s32.totalorder %v202, 0
    %vm228 = vcmp.ne.s32.totalorder %v204, 0
    %vm229 = vcmp.ne.s32.totalorder %v206, 0
    %vm230 = vcmp.ne.s32.totalorder %v208, 0
    %vm231 = vcmp.ne.s32.totalorder %v210, 0
    %vm232 = vcmp.ne.s32.totalorder %v212, 0
    %vm233 = vcmp.ne.s32.totalorder %v214, 0
    %vm234 = vcmp.ne.s32.totalorder %v216, 0
    %vm235 = vcmp.ne.s32.totalorder %v218, 0
    %vm236 = vcmp.ne.s32.totalorder %v220, 0
    %vm237 = vmor %vm157, %vm221
    %vm238 = vmor %vm158, %vm222
    %vm239 = vmor %vm159, %vm223
    %vm240 = vmor %vm160, %vm224
    %vm241 = vmor %vm161, %vm225
    %vm242 = vmor %vm162, %vm226
    %vm243 = vmor %vm163, %vm227
    %vm244 = vmor %vm164, %vm228
    %vm245 = vmor %vm165, %vm229
    %vm246 = vmor %vm166, %vm230
    %vm247 = vmor %vm167, %vm231
    %vm248 = vmor %vm168, %vm232
    %vm249 = vmor %vm169, %vm233
    %vm250 = vmor %vm170, %vm234
    %vm251 = vmor %vm171, %vm235
    %vm252 = vmor %vm172, %vm236
    %253 = vset.pattern.permute.xlu0 4
    %254 = vperm.xlu0 %253, %v40
    %v255 = vpop.permute.xlu0 %254
    %v256 = vlaneseq
    %v257 = vshrl.u32 %v256, 7
    %v258 = vsub.s32 0, %v257
    %v259 = vrot.slane %v255, %v258
    %260 = vset.pattern.permute.xlu0 4
    %261 = vperm.xlu0 %260, %v41
    %v262 = vpop.permute.xlu0 %261
    %v263 = vlaneseq
    %v264 = vshrl.u32 %v263, 7
    %v265 = vsub.s32 0, %v264
    %v266 = vrot.slane %v262, %v265
    %vm267 = vcmp.ge.s32.totalorder %v52, %v259
    %vm268 = vcmp.ge.s32.totalorder %v52, %v266
    %269 = vset.pattern.permute.xlu0 5
    %270 = vperm.xlu0 %269, %v40
    %v271 = vpop.permute.xlu0 %270
    %v272 = vlaneseq
    %v273 = vshrl.u32 %v272, 7
    %v274 = vsub.s32 0, %v273
    %v275 = vrot.slane %v271, %v274
    %276 = vset.pattern.permute.xlu0 5
    %277 = vperm.xlu0 %276, %v41
    %v278 = vpop.permute.xlu0 %277
    %v279 = vlaneseq
    %v280 = vshrl.u32 %v279, 7
    %v281 = vsub.s32 0, %v280
    %v282 = vrot.slane %v278, %v281
    %vm283 = vcmp.lt.s32.totalorder %v52, %v275
    %vm284 = vcmp.lt.s32.totalorder %v52, %v282
    %vm285 = vmand %vm267, %vm283
    %vm286 = vmand %vm268, %vm284
    %287 = vset.pattern.permute.xlu0 6
    %288 = vperm.xlu0 %287, %v40
    %v289 = vpop.permute.xlu0 %288
    %v290 = vlaneseq
    %v291 = vshrl.u32 %v290, 7
    %v292 = vsub.s32 0, %v291
    %v293 = vrot.slane %v289, %v292
    %294 = vset.pattern.permute.xlu0 6
    %295 = vperm.xlu0 %294, %v41
    %v296 = vpop.permute.xlu0 %295
    %v297 = vlaneseq
    %v298 = vshrl.u32 %v297, 7
    %v299 = vsub.s32 0, %v298
    %v300 = vrot.slane %v296, %v299
    %vm301 = vcmp.ge.s32.totalorder %v52, %v293
    %vm302 = vcmp.ge.s32.totalorder %v52, %v300
    %303 = vset.pattern.permute.xlu0 7
    %304 = vperm.xlu0 %303, %v40
    %v305 = vpop.permute.xlu0 %304
    %v306 = vlaneseq
    %v307 = vshrl.u32 %v306, 7
    %v308 = vsub.s32 0, %v307
    %v309 = vrot.slane %v305, %v308
    %310 = vset.pattern.permute.xlu0 7
    %311 = vperm.xlu0 %310, %v41
    %v312 = vpop.permute.xlu0 %311
    %v313 = vlaneseq
    %v314 = vshrl.u32 %v313, 7
    %v315 = vsub.s32 0, %v314
    %v316 = vrot.slane %v312, %v315
    %vm317 = vcmp.lt.s32.totalorder %v52, %v309
    %vm318 = vcmp.lt.s32.totalorder %v52, %v316
    %vm319 = vmand %vm301, %vm317
    %vm320 = vmand %vm302, %vm318
    %vm321 = vmor %vm285, %vm319
    %vm322 = vmor %vm286, %vm320
    %v323 = vld [vmem:[#allocation2] sm:$0xff]
    %v324 = vld [vmem:[#allocation2 + $0x8] sm:$0xff]
    %v325 = vld [vmem:[#allocation2 + $0x10] sm:$0xff]
    %v326 = vld [vmem:[#allocation2 + $0x18] sm:$0xff]
    %v327 = vld [vmem:[#allocation2 + $0x20] sm:$0xff]
    %v328 = vld [vmem:[#allocation2 + $0x28] sm:$0xff]
    %v329 = vld [vmem:[#allocation2 + $0x30] sm:$0xff]
    %v330 = vld [vmem:[#allocation2 + $0x38] sm:$0xff]
    %v331 = vld [vmem:[#allocation2 + $0x40] sm:$0xff]
    %v332 = vld [vmem:[#allocation2 + $0x48] sm:$0xff]
    %v333 = vld [vmem:[#allocation2 + $0x50] sm:$0xff]
    %v334 = vld [vmem:[#allocation2 + $0x58] sm:$0xff]
    %v335 = vld [vmem:[#allocation2 + $0x60] sm:$0xff]
    %v336 = vld [vmem:[#allocation2 + $0x68] sm:$0xff]
    %v337 = vld [vmem:[#allocation2 + $0x70] sm:$0xff]
    %v338 = vld [vmem:[#allocation2 + $0x78] sm:$0xff]
    %v339 = vsel %vm237, 1, 0
    %v340 = vsel %vm238, 1, 0
    %v341 = vsel %vm239, 1, 0
    %v342 = vsel %vm240, 1, 0
    %v343 = vsel %vm241, 1, 0
    %v344 = vsel %vm242, 1, 0
    %v345 = vsel %vm243, 1, 0
    %v346 = vsel %vm244, 1, 0
    %v347 = vsel %vm245, 1, 0
    %v348 = vsel %vm246, 1, 0
    %v349 = vsel %vm247, 1, 0
    %v350 = vsel %vm248, 1, 0
    %v351 = vsel %vm249, 1, 0
    %v352 = vsel %vm250, 1, 0
    %v353 = vsel %vm251, 1, 0
    %v354 = vsel %vm252, 1, 0
    %355 = vset.pattern.permute.xlu0 0
    %356 = vperm.xlu0 %355, %v339
    %v357 = vpop.permute.xlu0 %356
    %358 = vset.pattern.permute.xlu0 0
    %359 = vperm.xlu0 %358, %v340
    %v360 = vpop.permute.xlu0 %359
    %361 = vset.pattern.permute.xlu0 0
    %362 = vperm.xlu0 %361, %v341
    %v363 = vpop.permute.xlu0 %362
    %364 = vset.pattern.permute.xlu0 0
    %365 = vperm.xlu0 %364, %v342
    %v366 = vpop.permute.xlu0 %365
    %367 = vset.pattern.permute.xlu0 0
    %368 = vperm.xlu0 %367, %v343
    %v369 = vpop.permute.xlu0 %368
    %370 = vset.pattern.permute.xlu0 0
    %371 = vperm.xlu0 %370, %v344
    %v372 = vpop.permute.xlu0 %371
    %373 = vset.pattern.permute.xlu0 0
    %374 = vperm.xlu0 %373, %v345
    %v375 = vpop.permute.xlu0 %374
    %376 = vset.pattern.permute.xlu0 0
    %377 = vperm.xlu0 %376, %v346
    %v378 = vpop.permute.xlu0 %377
    %379 = vset.pattern.permute.xlu0 0
    %380 = vperm.xlu0 %379, %v347
    %v381 = vpop.permute.xlu0 %380
    %382 = vset.pattern.permute.xlu0 0
    %383 = vperm.xlu0 %382, %v348
    %v384 = vpop.permute.xlu0 %383
    %385 = vset.pattern.permute.xlu0 0
    %386 = vperm.xlu0 %385, %v349
    %v387 = vpop.permute.xlu0 %386
    %388 = vset.pattern.permute.xlu0 0
    %389 = vperm.xlu0 %388, %v350
    %v390 = vpop.permute.xlu0 %389
    %391 = vset.pattern.permute.xlu0 0
    %392 = vperm.xlu0 %391, %v351
    %v393 = vpop.permute.xlu0 %392
    %394 = vset.pattern.permute.xlu0 0
    %395 = vperm.xlu0 %394, %v352
    %v396 = vpop.permute.xlu0 %395
    %397 = vset.pattern.permute.xlu0 0
    %398 = vperm.xlu0 %397, %v353
    %v399 = vpop.permute.xlu0 %398
    %400 = vset.pattern.permute.xlu0 0
    %401 = vperm.xlu0 %400, %v354
    %v402 = vpop.permute.xlu0 %401
    %vm403 = vcmp.eq.s32.totalorder %v357, 1
    %vm404 = vcmp.eq.s32.totalorder %v360, 1
    %vm405 = vcmp.eq.s32.totalorder %v363, 1
    %vm406 = vcmp.eq.s32.totalorder %v366, 1
    %vm407 = vcmp.eq.s32.totalorder %v369, 1
    %vm408 = vcmp.eq.s32.totalorder %v372, 1
    %vm409 = vcmp.eq.s32.totalorder %v375, 1
    %vm410 = vcmp.eq.s32.totalorder %v378, 1
    %vm411 = vcmp.eq.s32.totalorder %v381, 1
    %vm412 = vcmp.eq.s32.totalorder %v384, 1
    %vm413 = vcmp.eq.s32.totalorder %v387, 1
    %vm414 = vcmp.eq.s32.totalorder %v390, 1
    %vm415 = vcmp.eq.s32.totalorder %v393, 1
    %vm416 = vcmp.eq.s32.totalorder %v396, 1
    %vm417 = vcmp.eq.s32.totalorder %v399, 1
    %vm418 = vcmp.eq.s32.totalorder %v402, 1
    %v419 = vsel %vm321, 1, 0
    %v420 = vsel %vm322, 1, 0
    %vm421 = vcmp.eq.s32.totalorder %v419, 1
    %vm422 = vcmp.eq.s32.totalorder %v420, 1
    %vm423 = vmor %vm403, %vm421
    %vm424 = vmor %vm404, %vm421
    %vm425 = vmor %vm405, %vm421
    %vm426 = vmor %vm406, %vm421
    %vm427 = vmor %vm407, %vm421
    %vm428 = vmor %vm408, %vm421
    %vm429 = vmor %vm409, %vm421
    %vm430 = vmor %vm410, %vm421
    %vm431 = vmor %vm411, %vm422
    %vm432 = vmor %vm412, %vm422
    %vm433 = vmor %vm413, %vm422
    %vm434 = vmor %vm414, %vm422
    %vm435 = vmor %vm415, %vm422
    %vm436 = vmor %vm416, %vm422
    %vm437 = vmor %vm417, %vm422
    %vm438 = vmor %vm418, %vm422
    %v439 = vsel %vm423, 0.0, %v323
    %v440 = vsel %vm424, 0.0, %v324
    %v441 = vsel %vm425, 0.0, %v325
    %v442 = vsel %vm426, 0.0, %v326
    %v443 = vsel %vm427, 0.0, %v327
    %v444 = vsel %vm428, 0.0, %v328
    %v445 = vsel %vm429, 0.0, %v329
    %v446 = vsel %vm430, 0.0, %v330
    %v447 = vsel %vm431, 0.0, %v331
    %v448 = vsel %vm432, 0.0, %v332
    %v449 = vsel %vm433, 0.0, %v333
    %v450 = vsel %vm434, 0.0, %v334
    %v451 = vsel %vm435, 0.0, %v335
    %v452 = vsel %vm436, 0.0, %v336
    %v453 = vsel %vm437, 0.0, %v337
    %v454 = vsel %vm438, 0.0, %v338
    %455 = vst [vmem:[#allocation7] sm:$0xff] %v439
    %456 = vst [vmem:[#allocation7 + $0x8] sm:$0xff] %v440
    %457 = vst [vmem:[#allocation7 + $0x10] sm:$0xff] %v441
    %458 = vst [vmem:[#allocation7 + $0x18] sm:$0xff] %v442
    %459 = vst [vmem:[#allocation7 + $0x20] sm:$0xff] %v443
    %460 = vst [vmem:[#allocation7 + $0x28] sm:$0xff] %v444
    %461 = vst [vmem:[#allocation7 + $0x30] sm:$0xff] %v445
    %462 = vst [vmem:[#allocation7 + $0x38] sm:$0xff] %v446
    %463 = vst [vmem:[#allocation7 + $0x40] sm:$0xff] %v447
    %464 = vst [vmem:[#allocation7 + $0x48] sm:$0xff] %v448
    %465 = vst [vmem:[#allocation7 + $0x50] sm:$0xff] %v449
    %466 = vst [vmem:[#allocation7 + $0x58] sm:$0xff] %v450
    %467 = vst [vmem:[#allocation7 + $0x60] sm:$0xff] %v451
    %468 = vst [vmem:[#allocation7 + $0x68] sm:$0xff] %v452
    %469 = vst [vmem:[#allocation7 + $0x70] sm:$0xff] %v453
    %470 = vst [vmem:[#allocation7 + $0x78] sm:$0xff] %v454
    // Predicated region
    $region18: #{spec_augment.1} parent=1 // pred_check
      _
    $region19: #{spec_augment.1} parent=1 // pred_check_branch
      %472 = sbr.rel (0) target = $region21
    $region20: #{spec_augment.1} parent=1 // pred_region
      %s474 = ssub.s32 2048, 2048
      %475 = vsyncadd [#allocation4], %s474
      %s476 = sshll.u32 [#allocation7], 4
      %s477 = int_to_ptr.vmem [resolvable:$true] %s476
      %482 = dma.vmem_to_hbm [thread:$0]  %s477, 2048, %s2, [#allocation4], 128, 128, 8
    $region21: #{spec_augment.1} parent=1 // pred_fallthru
      _
    // Predicated region
    $region22: #{spec_augment.1} parent=1 // pred_check
      _
    $region23: #{spec_augment.1} parent=1 // pred_check_branch
      %484 = sbr.rel (0) target = $region25
    $region24: #{spec_augment.1} parent=1 // pred_region
      %485 = dma.done [#allocation4], 2048
    $region25: #{spec_augment.1} parent=1 // pred_fallthru
      _
    %486 = vsyncpa [#allocation3], 1
    %487 = vsyncpa [#allocation6], 1
    %488 = vsyncpa [#allocation4], 1

</llo_original>
